<compile_context>
chip_gen: v5e
topology: v5e:2x2
jax: 0.10.0
libtpu: 0.0.40
codegen_flags: <defaults>
</compile_context>

<pallas_src>
import functools

import jax
import jax.numpy as jnp
from jax.experimental import pallas as pl
from jax.experimental.pallas import tpu as pltpu


def _quick_gelu(v):
    # QuickGELU: x * sigmoid(1.702 * x)  (kept in f32)
    return v * jax.nn.sigmoid(1.702 * v)


def _round_up(v, m):
    return ((v + m - 1) // m) * m


def decoder_kernel(x_ref,
                   w0_ref, b0_ref,
                   w1_ref, b1_ref,
                   w2_ref, b2_ref,
                   w3_ref, b3_ref,
                   o_ref):
    # x tile: (TM, D0) bf16; weights bf16; biases f32; accumulate in f32.
    h = jnp.dot(x_ref[...], w0_ref[...],
                preferred_element_type=jnp.float32) + b0_ref[...]
    h = _quick_gelu(h).astype(jnp.bfloat16)          # self.linear + gelu
    h = jnp.dot(h, w1_ref[...],
                preferred_element_type=jnp.float32) + b1_ref[...]
    h = _quick_gelu(h).astype(jnp.bfloat16)          # deproj[0] + deproj[1]
    h = jnp.dot(h, w2_ref[...],
                preferred_element_type=jnp.float32) + b2_ref[...]
    h = _quick_gelu(h).astype(jnp.bfloat16)          # deproj[2] + deproj[3]
    h = jnp.dot(h, w3_ref[...],
                preferred_element_type=jnp.float32) + b3_ref[...]
    o_ref[...] = h.astype(o_ref.dtype)               # deproj[4] (no activation)


def decoder_forward(x, params, *, n_h, patch_size, output_dim, tm=256):
    """x: (b, seq, embed_dim) f32 -> (b, output_dim, n_h*patch, n_h*patch) f32."""
    b, seq, E = x.shape
    M = b * seq
    P = output_dim * patch_size * patch_size
    (w0, b0, w1, b1, w2, b2, w3, b3) = params

    # Lane-aligned (multiple-of-128) feature dims.
    D0 = _round_up(E, 128)
    D1 = _round_up(w1.shape[1], 128)      # 2E
    D2 = _round_up(w2.shape[1], 128)      # 4E
    D3 = _round_up(P, 128)                # output_dim * patch^2

    # Token tiling: TM rows per grid step (multiple of 8); pad M up to TM.
    M8 = _round_up(M, 8)
    TM = tm if M8 >= tm else M8
    Mp = _round_up(M, TM)
    grid = (Mp // TM,)

    # --- pad + cast inputs (zero padding; QuickGELU(0)==0 keeps it inert) ---
    x2d = x.reshape(M, E).astype(jnp.bfloat16)
    x_pad = jnp.zeros((Mp, D0), jnp.bfloat16).at[:M, :E].set(x2d)

    def pad_w(w, din, dout):
        return (jnp.zeros((din, dout), jnp.bfloat16)
                .at[:w.shape[0], :w.shape[1]].set(w.astype(jnp.bfloat16)))

    def pad_b(bv, d):
        return jnp.zeros((1, d), jnp.float32).at[:, :bv.shape[1]].set(bv)

    w0p, b0p = pad_w(w0, D0, D0), pad_b(b0, D0)
    w1p, b1p = pad_w(w1, D0, D1), pad_b(b1, D1)
    w2p, b2p = pad_w(w2, D1, D2), pad_b(b2, D2)
    w3p, b3p = pad_w(w3, D2, D3), pad_b(b3, D3)

    def const_spec(shape):
        # Whole array, same block every step -> stays VMEM resident.
        return pl.BlockSpec(shape, lambda i: (0,) * len(shape))

    # --- explicit VMEM budget (bytes) ---
    weight_bytes = (D0 * D0 + D0 * D1 + D1 * D2 + D2 * D3) * 2      # bf16
    bias_bytes = (D0 + D1 + D2 + D3) * 4                            # f32
    io_bytes = 2 * TM * (D0 * 2 + D3 * 4)                           # 2x buffered x / out
    interm_bytes = 2 * TM * (D1 + D2) * 4                           # live f32 intermediates
    vmem_limit = 2 * weight_bytes + 2 * bias_bytes + io_bytes + interm_bytes + (4 << 20)
    vmem_limit = int(min(max(vmem_limit, 32 << 20), 128 << 20))

    out_pad = pl.pallas_call(
        decoder_kernel,
        out_shape=jax.ShapeDtypeStruct((Mp, D3), jnp.float32),
        grid=grid,
        in_specs=[
            pl.BlockSpec((TM, D0), lambda i: (i, 0)),
            const_spec((D0, D0)), const_spec((1, D0)),
            const_spec((D0, D1)), const_spec((1, D1)),
            const_spec((D1, D2)), const_spec((1, D2)),
            const_spec((D2, D3)), const_spec((1, D3)),
        ],
        out_specs=pl.BlockSpec((TM, D3), lambda i: (i, 0)),
        compiler_params=pltpu.CompilerParams(
            dimension_semantics=("parallel",),
            vmem_limit_bytes=vmem_limit,
        ),
    )(x_pad, w0p, b0p, w1p, b1p, w2p, b2p, w3p, b3p)

    out2d = out_pad[:M, :P]

    # rearrange 'b (n_h n_w) (c h w) -> b c (n_h h) (n_w w)'
    c, h = output_dim, patch_size
    y = out2d.reshape(b, n_h, n_h, c, h, h)
    y = jnp.transpose(y, (0, 3, 1, 4, 2, 5))          # b c n_h h n_w w
    return y.reshape(b, c, n_h * h, n_h * h)


def init_params(key, embed_dim, output_dim, patch_size):
    """Deterministic synthetic weights. Stored as (in, out) so kernel does x @ W + b."""
    E = embed_dim
    P = output_dim * patch_size * patch_size
    dims = [(E, E), (E, 2 * E), (2 * E, 4 * E), (4 * E, P)]
    params = []
    for i, (din, dout) in enumerate(dims):
        kw, kb = jax.random.split(jax.random.fold_in(key, i))
        scale = 1.0 / jnp.sqrt(jnp.float32(din))
        w = jax.random.uniform(kw, (din, dout), jnp.float32, -scale, scale)
        bias = jax.random.uniform(kb, (1, dout), jnp.float32, -scale, scale)
        params += [w, bias]
    return tuple(params)


def reference_forward(x, params, *, n_h, patch_size, output_dim):
    """Pure-JAX reference with the same bf16-matmul / f32-accumulate math."""
    (w0, b0, w1, b1, w2, b2, w3, b3) = params
    b, seq, E = x.shape

    def mm(a, w):
        return jnp.dot(a.astype(jnp.bfloat16), w.astype(jnp.bfloat16),
                       preferred_element_type=jnp.float32)

    h = x.reshape(b * seq, E)
    h = _quick_gelu(mm(h, w0) + b0)
    h = _quick_gelu(mm(h, w1) + b1)
    h = _quick_gelu(mm(h, w2) + b2)
    h = mm(h, w3) + b3
    c, hh = output_dim, patch_size
    y = h.reshape(b, n_h, n_h, c, hh, hh)
    y = jnp.transpose(y, (0, 3, 1, 4, 2, 5))
    return y.reshape(b, c, n_h * hh, n_h * hh)


if __name__ == "__main__":
    # Small shapes consistent with the module:
    # embed_dim=32, output_dim=1, patch_size=8, output_size=16 -> n_h=2, seq=4
    embed_dim = 32
    output_dim = 1
    patch_size = 8
    output_size = 16
    n_h = output_size // patch_size
    seq = n_h * n_h
    batch = 2

    key = jax.random.PRNGKey(0)
    kx, kp = jax.random.split(key)
    x = jax.random.normal(kx, (batch, seq, embed_dim), jnp.float32)
    params = init_params(kp, embed_dim, output_dim, patch_size)

    fwd = functools.partial(decoder_forward, n_h=n_h, patch_size=patch_size,
                            output_dim=output_dim)
    out = jax.block_until_ready(fwd(x, params))

    ref = reference_forward(x, params, n_h=n_h, patch_size=patch_size,
                            output_dim=output_dim)
    assert out.shape == (batch, output_dim, output_size, output_size), out.shape
    assert jnp.allclose(out, ref, atol=2e-3, rtol=2e-3), "mismatch vs reference"

    print("KERNEL_OK")
</pallas_src>

<mosaic_0001>
module attributes {stable_mosaic.version = 11 : i64} {
  func.func @decoder_kernel(%arg0: i32, %arg1: memref<8x128xbf16, #tpu.memory_space<vmem>>, %arg2: memref<128x128xbf16, #tpu.memory_space<vmem>>, %arg3: memref<1x128xf32, #tpu.memory_space<vmem>>, %arg4: memref<128x128xbf16, #tpu.memory_space<vmem>>, %arg5: memref<1x128xf32, #tpu.memory_space<vmem>>, %arg6: memref<128x128xbf16, #tpu.memory_space<vmem>>, %arg7: memref<1x128xf32, #tpu.memory_space<vmem>>, %arg8: memref<128x128xbf16, #tpu.memory_space<vmem>>, %arg9: memref<1x128xf32, #tpu.memory_space<vmem>>, %arg10: memref<8x128xf32, #tpu.memory_space<vmem>>) attributes {dimension_semantics = [#tpu.dimension_semantics<parallel>], iteration_bounds = array<i64: 1>, scalar_prefetch = 0 : i64, scratch_operands = 0 : i64, tpu.core_type = #tpu.core_type<tc>, window_params = [{transform_indices = @transform_0, window_bounds = array<i64: 8, 128>}, {pipeline_mode = #tpu.pipeline_mode<synchronous>, transform_indices = @transform_1, window_bounds = array<i64: 128, 128>}, {pipeline_mode = #tpu.pipeline_mode<synchronous>, transform_indices = @transform_2, window_bounds = array<i64: 1, 128>}, {pipeline_mode = #tpu.pipeline_mode<synchronous>, transform_indices = @transform_3, window_bounds = array<i64: 128, 128>}, {pipeline_mode = #tpu.pipeline_mode<synchronous>, transform_indices = @transform_4, window_bounds = array<i64: 1, 128>}, {pipeline_mode = #tpu.pipeline_mode<synchronous>, transform_indices = @transform_5, window_bounds = array<i64: 128, 128>}, {pipeline_mode = #tpu.pipeline_mode<synchronous>, transform_indices = @transform_6, window_bounds = array<i64: 1, 128>}, {pipeline_mode = #tpu.pipeline_mode<synchronous>, transform_indices = @transform_7, window_bounds = array<i64: 128, 128>}, {pipeline_mode = #tpu.pipeline_mode<synchronous>, transform_indices = @transform_8, window_bounds = array<i64: 1, 128>}, {transform_indices = @transform_9, window_bounds = array<i64: 8, 128>}]} {
    %c0 = arith.constant 0 : index
    %c0_0 = arith.constant 0 : index
    %0 = vector.load %arg1[%c0, %c0_0] : memref<8x128xbf16, #tpu.memory_space<vmem>>, vector<8x128xbf16>
    %c0_1 = arith.constant 0 : index
    %c0_2 = arith.constant 0 : index
    %1 = vector.load %arg2[%c0_1, %c0_2] : memref<128x128xbf16, #tpu.memory_space<vmem>>, vector<128x128xbf16>
    %cst = arith.constant dense<0.000000e+00> : vector<8x128xf32>
    %2 = tpu.matmul %0, %1, %cst {dimension_numbers = #tpu.dot_dimension_numbers<[1], [0], [0], [1], [0, 0, 1, 1], [], []>} : vector<8x128xbf16>, vector<128x128xbf16>, vector<8x128xf32> -> vector<8x128xf32>
    %c0_3 = arith.constant 0 : index
    %c0_4 = arith.constant 0 : index
    %3 = vector.load %arg3[%c0_3, %c0_4] : memref<1x128xf32, #tpu.memory_space<vmem>>, vector<1x128xf32>
    %4 = vector.broadcast %3 : vector<1x128xf32> to vector<8x128xf32>
    %5 = arith.addf %2, %4 : vector<8x128xf32>
    %cst_5 = arith.constant 1.702000e+00 : f32
    %6 = vector.broadcast %cst_5 : f32 to vector<8x128xf32>
    %7 = arith.mulf %6, %5 : vector<8x128xf32>
    %8 = arith.negf %7 : vector<8x128xf32>
    %9 = math.exp %8 : vector<8x128xf32>
    %cst_6 = arith.constant 1.000000e+00 : f32
    %10 = vector.broadcast %cst_6 : f32 to vector<8x128xf32>
    %11 = arith.addf %10, %9 : vector<8x128xf32>
    %12 = arith.divf %10, %11 : vector<8x128xf32>
    %13 = arith.mulf %5, %12 : vector<8x128xf32>
    %14 = arith.truncf %13 : vector<8x128xf32> to vector<8x128xbf16>
    %c0_7 = arith.constant 0 : index
    %c0_8 = arith.constant 0 : index
    %15 = vector.load %arg4[%c0_7, %c0_8] : memref<128x128xbf16, #tpu.memory_space<vmem>>, vector<128x128xbf16>
    %cst_9 = arith.constant dense<0.000000e+00> : vector<8x128xf32>
    %16 = tpu.matmul %14, %15, %cst_9 {dimension_numbers = #tpu.dot_dimension_numbers<[1], [0], [0], [1], [0, 0, 1, 1], [], []>} : vector<8x128xbf16>, vector<128x128xbf16>, vector<8x128xf32> -> vector<8x128xf32>
    %c0_10 = arith.constant 0 : index
    %c0_11 = arith.constant 0 : index
    %17 = vector.load %arg5[%c0_10, %c0_11] : memref<1x128xf32, #tpu.memory_space<vmem>>, vector<1x128xf32>
    %18 = vector.broadcast %17 : vector<1x128xf32> to vector<8x128xf32>
    %19 = arith.addf %16, %18 : vector<8x128xf32>
    %cst_12 = arith.constant 1.702000e+00 : f32
    %20 = vector.broadcast %cst_12 : f32 to vector<8x128xf32>
    %21 = arith.mulf %20, %19 : vector<8x128xf32>
    %22 = arith.negf %21 : vector<8x128xf32>
    %23 = math.exp %22 : vector<8x128xf32>
    %cst_13 = arith.constant 1.000000e+00 : f32
    %24 = vector.broadcast %cst_13 : f32 to vector<8x128xf32>
    %25 = arith.addf %24, %23 : vector<8x128xf32>
    %26 = arith.divf %24, %25 : vector<8x128xf32>
    %27 = arith.mulf %19, %26 : vector<8x128xf32>
    %28 = arith.truncf %27 : vector<8x128xf32> to vector<8x128xbf16>
    %c0_14 = arith.constant 0 : index
    %c0_15 = arith.constant 0 : index
    %29 = vector.load %arg6[%c0_14, %c0_15] : memref<128x128xbf16, #tpu.memory_space<vmem>>, vector<128x128xbf16>
    %cst_16 = arith.constant dense<0.000000e+00> : vector<8x128xf32>
    %30 = tpu.matmul %28, %29, %cst_16 {dimension_numbers = #tpu.dot_dimension_numbers<[1], [0], [0], [1], [0, 0, 1, 1], [], []>} : vector<8x128xbf16>, vector<128x128xbf16>, vector<8x128xf32> -> vector<8x128xf32>
    %c0_17 = arith.constant 0 : index
    %c0_18 = arith.constant 0 : index
    %31 = vector.load %arg7[%c0_17, %c0_18] : memref<1x128xf32, #tpu.memory_space<vmem>>, vector<1x128xf32>
    %32 = vector.broadcast %31 : vector<1x128xf32> to vector<8x128xf32>
    %33 = arith.addf %30, %32 : vector<8x128xf32>
    %cst_19 = arith.constant 1.702000e+00 : f32
    %34 = vector.broadcast %cst_19 : f32 to vector<8x128xf32>
    %35 = arith.mulf %34, %33 : vector<8x128xf32>
    %36 = arith.negf %35 : vector<8x128xf32>
    %37 = math.exp %36 : vector<8x128xf32>
    %cst_20 = arith.constant 1.000000e+00 : f32
    %38 = vector.broadcast %cst_20 : f32 to vector<8x128xf32>
    %39 = arith.addf %38, %37 : vector<8x128xf32>
    %40 = arith.divf %38, %39 : vector<8x128xf32>
    %41 = arith.mulf %33, %40 : vector<8x128xf32>
    %42 = arith.truncf %41 : vector<8x128xf32> to vector<8x128xbf16>
    %c0_21 = arith.constant 0 : index
    %c0_22 = arith.constant 0 : index
    %43 = vector.load %arg8[%c0_21, %c0_22] : memref<128x128xbf16, #tpu.memory_space<vmem>>, vector<128x128xbf16>
    %cst_23 = arith.constant dense<0.000000e+00> : vector<8x128xf32>
    %44 = tpu.matmul %42, %43, %cst_23 {dimension_numbers = #tpu.dot_dimension_numbers<[1], [0], [0], [1], [0, 0, 1, 1], [], []>} : vector<8x128xbf16>, vector<128x128xbf16>, vector<8x128xf32> -> vector<8x128xf32>
    %c0_24 = arith.constant 0 : index
    %c0_25 = arith.constant 0 : index
    %45 = vector.load %arg9[%c0_24, %c0_25] : memref<1x128xf32, #tpu.memory_space<vmem>>, vector<1x128xf32>
    %46 = vector.broadcast %45 : vector<1x128xf32> to vector<8x128xf32>
    %47 = arith.addf %44, %46 : vector<8x128xf32>
    %c0_26 = arith.constant 0 : index
    %c0_27 = arith.constant 0 : index
    %48 = vector.load %arg10[%c0_26, %c0_27] : memref<8x128xf32, #tpu.memory_space<vmem>>, vector<8x128xf32>
    tpu.vector_store %arg10[%c0_26, %c0_27], %47 {strides = array<i32>} : memref<8x128xf32, #tpu.memory_space<vmem>>, vector<8x128xf32>,
    return
  }
  func.func @transform_0(%arg0: i32) -> (i32, i32) {
    %c0_i32 = arith.constant 0 : i32
    %c0_i32_0 = arith.constant 0 : i32
    return %arg0, %c0_i32 : i32, i32
  }
  func.func @transform_1(%arg0: i32) -> (i32, i32) {
    %c0_i32 = arith.constant 0 : i32
    %c0_i32_0 = arith.constant 0 : i32
    %c0_i32_1 = arith.constant 0 : i32
    return %c0_i32, %c0_i32_0 : i32, i32
  }
  func.func @transform_2(%arg0: i32) -> (i32, i32) {
    %c0_i32 = arith.constant 0 : i32
    %c0_i32_0 = arith.constant 0 : i32
    %c0_i32_1 = arith.constant 0 : i32
    return %c0_i32, %c0_i32_0 : i32, i32
  }
  func.func @transform_3(%arg0: i32) -> (i32, i32) {
    %c0_i32 = arith.constant 0 : i32
    %c0_i32_0 = arith.constant 0 : i32
    %c0_i32_1 = arith.constant 0 : i32
    return %c0_i32, %c0_i32_0 : i32, i32
  }
  func.func @transform_4(%arg0: i32) -> (i32, i32) {
    %c0_i32 = arith.constant 0 : i32
    %c0_i32_0 = arith.constant 0 : i32
    %c0_i32_1 = arith.constant 0 : i32
    return %c0_i32, %c0_i32_0 : i32, i32
  }
  func.func @transform_5(%arg0: i32) -> (i32, i32) {
    %c0_i32 = arith.constant 0 : i32
    %c0_i32_0 = arith.constant 0 : i32
    %c0_i32_1 = arith.constant 0 : i32
    return %c0_i32, %c0_i32_0 : i32, i32
  }
  func.func @transform_6(%arg0: i32) -> (i32, i32) {
    %c0_i32 = arith.constant 0 : i32
    %c0_i32_0 = arith.constant 0 : i32
    %c0_i32_1 = arith.constant 0 : i32
    return %c0_i32, %c0_i32_0 : i32, i32
  }
  func.func @transform_7(%arg0: i32) -> (i32, i32) {
    %c0_i32 = arith.constant 0 : i32
    %c0_i32_0 = arith.constant 0 : i32
    %c0_i32_1 = arith.constant 0 : i32
    return %c0_i32, %c0_i32_0 : i32, i32
  }
  func.func @transform_8(%arg0: i32) -> (i32, i32) {
    %c0_i32 = arith.constant 0 : i32
    %c0_i32_0 = arith.constant 0 : i32
    %c0_i32_1 = arith.constant 0 : i32
    return %c0_i32, %c0_i32_0 : i32, i32
  }
  func.func @transform_9(%arg0: i32) -> (i32, i32) {
    %c0_i32 = arith.constant 0 : i32
    %c0_i32_0 = arith.constant 0 : i32
    return %arg0, %c0_i32 : i32, i32
  }
}

</mosaic_0001>

<llo_original>
// kernel: tpu_custom_call.1
$region0: #{tpu_custom_call.1}
  #allocation0 [shape = 'u32[]', space=smem, size = 0x4, offset = 0x4, fixed_abs, tag = 'smem constant byte address 0x4 - core index']
  #allocation1 [shape = 'u32[72,128]{1,0:T(1,128)}', space=vmem, size = 0x9000, scoped, tag = 'internal scratch']
  %s0 = inlined_call_operand.hbm [shape: bf16[8,128], index: 0, kind: input, shape index: {}]
  %s1 = inlined_call_operand.hbm [shape: bf16[128,128], index: 1, kind: input, shape index: {}]
  %s2 = inlined_call_operand.vmem [shape: f32[1,128], index: 2, kind: input, shape index: {}]
  %s3 = inlined_call_operand.hbm [shape: bf16[128,128], index: 3, kind: input, shape index: {}]
  %s4 = inlined_call_operand.vmem [shape: f32[1,128], index: 4, kind: input, shape index: {}]
  %s5 = inlined_call_operand.hbm [shape: bf16[128,128], index: 5, kind: input, shape index: {}]
  %s6 = inlined_call_operand.vmem [shape: f32[1,128], index: 6, kind: input, shape index: {}]
  %s7 = inlined_call_operand.hbm [shape: bf16[128,128], index: 7, kind: input, shape index: {}]
  %s8 = inlined_call_operand.vmem [shape: f32[1,128], index: 8, kind: input, shape index: {}]
  %s9 = inlined_call_operand.hbm [shape: f32[8,128], index: 9, kind: output, shape index: {}]
  %s10 = sld [smem:[#allocation0]]
  $region66: #{tpu_custom_call.1} parent=0
    _
  %s12 = ssub.s32 1, %s10
  %s13 = scalar_select 0, %s12, %s10
  $region1: #{tpu_custom_call.1} parent=0
    #allocation2 [shape = 'u8[2048]{0}', space=vmem, size = 0x800, scoped, tag = 'input window, operand 0, single buffered']
    #allocation3 [shape = 's32[1]{0}', space=sflag, size = 0x4, scoped, tag = 'scoped memory for tpu_custom_call.1']
    #allocation4 [shape = 's32[1]{0}', space=sflag, size = 0x4, scoped, tag = 'scoped memory for tpu_custom_call.1']
    #allocation5 [shape = 'u8[32768]{0}', space=vmem, size = 0x8000, scoped, tag = 'input window, operand 1, single buffered']
    #allocation6 [shape = 's32[1]{0}', space=sflag, size = 0x4, scoped, tag = 'scoped memory for tpu_custom_call.1']
    #allocation7 [shape = 'u8[32768]{0}', space=vmem, size = 0x8000, scoped, tag = 'input window, operand 3, single buffered']
    #allocation8 [shape = 'u8[32768]{0}', space=vmem, size = 0x8000, scoped, tag = 'input window, operand 5, single buffered']
    #allocation9 [shape = 's32[1]{0}', space=sflag, size = 0x4, scoped, tag = 'scoped memory for tpu_custom_call.1']
    #allocation10 [shape = 'u8[32768]{0}', space=vmem, size = 0x8000, scoped, tag = 'input window, operand 7, single buffered']
    #allocation11 [shape = 'u8[4096]{0}', space=vmem, size = 0x1000, scoped, tag = 'output window, operand 0, single buffered']
    %14 = vsyncpa [#allocation3], 0
    %15 = vsyncpa [#allocation6], 0
    %16 = vsyncpa [#allocation9], 0
    %17 = vsyncpa [#allocation4], 0
    // Predicated region
    $region2: #{tpu_custom_call.1} parent=1 // pred_check
      _
    $region3: #{tpu_custom_call.1} parent=1 // pred_check_branch
      %19 = sbr.rel (0) target = $region5
    $region4: #{tpu_custom_call.1} parent=1 // pred_region
      %21 = vsyncadd [#allocation3], 0
      %s23 = sshll.u32 %s0, 4
      %s24 = int_to_ptr.hbm [resolvable:$true] %s23
      %s25 = sshll.u32 [#allocation2], 4
      %s26 = int_to_ptr.vmem [resolvable:$true] %s25
      %28 = dma.hbm_to_vmem [thread:$0]  %s24, 64, %s26, [#allocation3]
    $region5: #{tpu_custom_call.1} parent=1 // pred_fallthru
      _
    // Predicated region
    $region6: #{tpu_custom_call.1} parent=1 // pred_check
      _
    $region7: #{tpu_custom_call.1} parent=1 // pred_check_branch
      %30 = sbr.rel (0) target = $region9
    $region8: #{tpu_custom_call.1} parent=1 // pred_region
      %32 = vsyncadd [#allocation6], 0
      %s33 = sshll.u32 %s1, 4
      %s34 = int_to_ptr.hbm [resolvable:$true] %s33
      %s35 = sshll.u32 [#allocation5], 4
      %s36 = int_to_ptr.vmem [resolvable:$true] %s35
      %41 = dma.hbm_to_vmem [thread:$0]  %s34, 1024, %s36, [#allocation6], 64, 64, 4
    $region9: #{tpu_custom_call.1} parent=1 // pred_fallthru
      _
    // Predicated region
    $region10: #{tpu_custom_call.1} parent=1 // pred_check
      _
    $region11: #{tpu_custom_call.1} parent=1 // pred_check_branch
      %43 = sbr.rel (0) target = $region13
    $region12: #{tpu_custom_call.1} parent=1 // pred_region
      _
    $region13: #{tpu_custom_call.1} parent=1 // pred_fallthru
      _
    // Predicated region
    $region14: #{tpu_custom_call.1} parent=1 // pred_check
      _
    $region15: #{tpu_custom_call.1} parent=1 // pred_check_branch
      %45 = sbr.rel (0) target = $region17
    $region16: #{tpu_custom_call.1} parent=1 // pred_region
      %47 = vsyncadd [#allocation6], 0
      %s48 = sshll.u32 %s3, 4
      %s49 = int_to_ptr.hbm [resolvable:$true] %s48
      %s50 = sshll.u32 [#allocation7], 4
      %s51 = int_to_ptr.vmem [resolvable:$true] %s50
      %56 = dma.hbm_to_vmem [thread:$0]  %s49, 1024, %s51, [#allocation6], 64, 64, 4
    $region17: #{tpu_custom_call.1} parent=1 // pred_fallthru
      _
    // Predicated region
    $region18: #{tpu_custom_call.1} parent=1 // pred_check
      _
    $region19: #{tpu_custom_call.1} parent=1 // pred_check_branch
      %58 = sbr.rel (0) target = $region21
    $region20: #{tpu_custom_call.1} parent=1 // pred_region
      _
    $region21: #{tpu_custom_call.1} parent=1 // pred_fallthru
      _
    // Predicated region
    $region22: #{tpu_custom_call.1} parent=1 // pred_check
      _
    $region23: #{tpu_custom_call.1} parent=1 // pred_check_branch
      %60 = sbr.rel (0) target = $region25
    $region24: #{tpu_custom_call.1} parent=1 // pred_region
      %62 = vsyncadd [#allocation9], 0
      %s63 = sshll.u32 %s5, 4
      %s64 = int_to_ptr.hbm [resolvable:$true] %s63
      %s65 = sshll.u32 [#allocation8], 4
      %s66 = int_to_ptr.vmem [resolvable:$true] %s65
      %71 = dma.hbm_to_vmem [thread:$0]  %s64, 1024, %s66, [#allocation9], 64, 64, 4
    $region25: #{tpu_custom_call.1} parent=1 // pred_fallthru
      _
    // Predicated region
    $region26: #{tpu_custom_call.1} parent=1 // pred_check
      _
    $region27: #{tpu_custom_call.1} parent=1 // pred_check_branch
      %73 = sbr.rel (0) target = $region29
    $region28: #{tpu_custom_call.1} parent=1 // pred_region
      _
    $region29: #{tpu_custom_call.1} parent=1 // pred_fallthru
      _
    // Predicated region
    $region30: #{tpu_custom_call.1} parent=1 // pred_check
      _
    $region31: #{tpu_custom_call.1} parent=1 // pred_check_branch
      %75 = sbr.rel (0) target = $region33
    $region32: #{tpu_custom_call.1} parent=1 // pred_region
      %77 = vsyncadd [#allocation9], 0
      %s78 = sshll.u32 %s7, 4
      %s79 = int_to_ptr.hbm [resolvable:$true] %s78
      %s80 = sshll.u32 [#allocation10], 4
      %s81 = int_to_ptr.vmem [resolvable:$true] %s80
      %86 = dma.hbm_to_vmem [thread:$0]  %s79, 1024, %s81, [#allocation9], 64, 64, 4
    $region33: #{tpu_custom_call.1} parent=1 // pred_fallthru
      _
    // Predicated region
    $region34: #{tpu_custom_call.1} parent=1 // pred_check
      _
    $region35: #{tpu_custom_call.1} parent=1 // pred_check_branch
      %88 = sbr.rel (0) target = $region37
    $region36: #{tpu_custom_call.1} parent=1 // pred_region
      _
    $region37: #{tpu_custom_call.1} parent=1 // pred_fallthru
      _
    // Predicated region
    $region38: #{tpu_custom_call.1} parent=1 // pred_check
      _
    $region39: #{tpu_custom_call.1} parent=1 // pred_check_branch
      %90 = sbr.rel (0) target = $region41
    $region40: #{tpu_custom_call.1} parent=1 // pred_region
      %92 = dma.done [#allocation3], 64
    $region41: #{tpu_custom_call.1} parent=1 // pred_fallthru
      _
    // Predicated region
    $region42: #{tpu_custom_call.1} parent=1 // pred_check
      _
    $region43: #{tpu_custom_call.1} parent=1 // pred_check_branch
      %94 = sbr.rel (0) target = $region45
    $region44: #{tpu_custom_call.1} parent=1 // pred_region
      %96 = dma.done [#allocation6], 1024
    $region45: #{tpu_custom_call.1} parent=1 // pred_fallthru
      _
    // Predicated region
    $region46: #{tpu_custom_call.1} parent=1 // pred_check
      _
    $region47: #{tpu_custom_call.1} parent=1 // pred_check_branch
      %98 = sbr.rel (0) target = $region49
    $region48: #{tpu_custom_call.1} parent=1 // pred_region
      %100 = dma.done [#allocation6], 1024
    $region49: #{tpu_custom_call.1} parent=1 // pred_fallthru
      _
    // Predicated region
    $region50: #{tpu_custom_call.1} parent=1 // pred_check
      _
    $region51: #{tpu_custom_call.1} parent=1 // pred_check_branch
      %102 = sbr.rel (0) target = $region53
    $region52: #{tpu_custom_call.1} parent=1 // pred_region
      %104 = dma.done [#allocation9], 1024
    $region53: #{tpu_custom_call.1} parent=1 // pred_fallthru
      _
    // Predicated region
    $region54: #{tpu_custom_call.1} parent=1 // pred_check
      _
    $region55: #{tpu_custom_call.1} parent=1 // pred_check_branch
      %106 = sbr.rel (0) target = $region57
    $region56: #{tpu_custom_call.1} parent=1 // pred_region
      %108 = dma.done [#allocation9], 1024
    $region57: #{tpu_custom_call.1} parent=1 // pred_fallthru
      _
    %v109 = vld [vmem:[#allocation2] sm:$0xf]
    %v110 = vld [vmem:[#allocation5] sm:$0xf]
    %v111 = vld [vmem:[#allocation5 + $0x4] sm:$0xf]
    %v112 = vld [vmem:[#allocation5 + $0x8] sm:$0xf]
    %v113 = vld [vmem:[#allocation5 + $0xc] sm:$0xf]
    %v114 = vld [vmem:[#allocation5 + $0x10] sm:$0xf]
    %v115 = vld [vmem:[#allocation5 + $0x14] sm:$0xf]
    %v116 = vld [vmem:[#allocation5 + $0x18] sm:$0xf]
    %v117 = vld [vmem:[#allocation5 + $0x1c] sm:$0xf]
    %v118 = vld [vmem:[#allocation5 + $0x20] sm:$0xf]
    %v119 = vld [vmem:[#allocation5 + $0x24] sm:$0xf]
    %v120 = vld [vmem:[#allocation5 + $0x28] sm:$0xf]
    %v121 = vld [vmem:[#allocation5 + $0x2c] sm:$0xf]
    %v122 = vld [vmem:[#allocation5 + $0x30] sm:$0xf]
    %v123 = vld [vmem:[#allocation5 + $0x34] sm:$0xf]
    %v124 = vld [vmem:[#allocation5 + $0x38] sm:$0xf]
    %v125 = vld [vmem:[#allocation5 + $0x3c] sm:$0xf]
    %v126 = vld [vmem:[%s2] sm:$0x1]
    %v128 = vperm.slane %v126, 0
    %v146 = vunpack.c.l.b16 %v110
    %v147 = vunpack.c.l.b16 %v111
    %v148 = vunpack.c.l.b16 %v112
    %v149 = vunpack.c.l.b16 %v113
    %v150 = vunpack.c.l.b16 %v114
    %v151 = vunpack.c.l.b16 %v115
    %v152 = vunpack.c.l.b16 %v116
    %v153 = vunpack.c.l.b16 %v117
    %v154 = vunpack.c.l.b16 %v118
    %v155 = vunpack.c.l.b16 %v119
    %v156 = vunpack.c.l.b16 %v120
    %v157 = vunpack.c.l.b16 %v121
    %v158 = vunpack.c.l.b16 %v122
    %v159 = vunpack.c.l.b16 %v123
    %v160 = vunpack.c.l.b16 %v124
    %v161 = vunpack.c.l.b16 %v125
    %v162 = vpack.c.b16 %v147, %v146
    %v163 = vpack.c.b16 %v149, %v148
    %v164 = vpack.c.b16 %v151, %v150
    %v165 = vpack.c.b16 %v153, %v152
    %v166 = vpack.c.b16 %v155, %v154
    %v167 = vpack.c.b16 %v157, %v156
    %v168 = vpack.c.b16 %v159, %v158
    %v169 = vpack.c.b16 %v161, %v160
    %178 = vmatpush.bf16.msra.mxu0 %v169
    %179 = vmatpush.bf16.msra.mxu0 %v168
    %180 = vmatpush.bf16.msra.mxu0 %v167
    %181 = vmatpush.bf16.msra.mxu0 %v166
    %182 = vmatpush.bf16.msra.mxu0 %v165
    %183 = vmatpush.bf16.msra.mxu0 %v164
    %184 = vmatpush.bf16.msra.mxu0 %v163
    %185 = vmatpush.bf16.msra.mxu0 %v162
    %186 = vmatmul.bf16.gmra.mxu0 %v109
    %v187 = vpop.f32.mrf.mxu0
    %v188 = vadd.f32 %v128, %v187
    %v189 = vpop.f32.mrf.mxu0
    %190 = vdwg.mxu0
    %v191 = vmul.f32 %v188, 1.702
    %v192 = vxor.u32 %v191, 2147483648
    %v193 = vmul.f32 %v192, 1.442695
    %v194 = vpow.pop %v193
    %v195 = vadd.f32 %v194, 1.0
    %v196 = vrcp.pop %v195
    %v197 = vmul.f32 %v195, %v196
    %v198 = vsub.f32 1.0, %v197
    %v199 = vmul.f32 %v196, %v198
    %v200 = vadd.f32 %v196, %v199
    %vm201 = vweird.f32 %v195
    %vm202 = vweird.f32 %v196
    %vm203 = vmor %vm201, %vm202
    %v204 = vsel %vm203, %v196, %v200
    %v205 = vand.u32 2147483647, %v195
    %vm206 = vcmp.eq.f32.partialorder %v205, 8.507059e+37
    %v207 = vand.u32 %v195, 2147483648
    %v208 = vor.u32 1.1754944e-38, %v207
    %v209 = vsel %vm206, %v208, %v204
    %v210 = vmul.f32 1.0, %v209
    %v211 = vmul.f32 %v188, %v210
    %v212 = vpack.c.bf16 %v211, %v211
    %v213 = vld [vmem:[#allocation7] sm:$0xf]
    %v214 = vld [vmem:[#allocation7 + $0x4] sm:$0xf]
    %v215 = vld [vmem:[#allocation7 + $0x8] sm:$0xf]
    %v216 = vld [vmem:[#allocation7 + $0xc] sm:$0xf]
    %v217 = vld [vmem:[#allocation7 + $0x10] sm:$0xf]
    %v218 = vld [vmem:[#allocation7 + $0x14] sm:$0xf]
    %v219 = vld [vmem:[#allocation7 + $0x18] sm:$0xf]
    %v220 = vld [vmem:[#allocation7 + $0x1c] sm:$0xf]
    %v221 = vld [vmem:[#allocation7 + $0x20] sm:$0xf]
    %v222 = vld [vmem:[#allocation7 + $0x24] sm:$0xf]
    %v223 = vld [vmem:[#allocation7 + $0x28] sm:$0xf]
    %v224 = vld [vmem:[#allocation7 + $0x2c] sm:$0xf]
    %v225 = vld [vmem:[#allocation7 + $0x30] sm:$0xf]
    %v226 = vld [vmem:[#allocation7 + $0x34] sm:$0xf]
    %v227 = vld [vmem:[#allocation7 + $0x38] sm:$0xf]
    %v228 = vld [vmem:[#allocation7 + $0x3c] sm:$0xf]
    %v229 = vld [vmem:[%s4] sm:$0x1]
    %v231 = vperm.slane %v229, 0
    %v249 = vunpack.c.l.b16 %v213
    %v250 = vunpack.c.l.b16 %v214
    %v251 = vunpack.c.l.b16 %v215
    %v252 = vunpack.c.l.b16 %v216
    %v253 = vunpack.c.l.b16 %v217
    %v254 = vunpack.c.l.b16 %v218
    %v255 = vunpack.c.l.b16 %v219
    %v256 = vunpack.c.l.b16 %v220
    %v257 = vunpack.c.l.b16 %v221
    %v258 = vunpack.c.l.b16 %v222
    %v259 = vunpack.c.l.b16 %v223
    %v260 = vunpack.c.l.b16 %v224
    %v261 = vunpack.c.l.b16 %v225
    %v262 = vunpack.c.l.b16 %v226
    %v263 = vunpack.c.l.b16 %v227
    %v264 = vunpack.c.l.b16 %v228
    %v265 = vpack.c.b16 %v250, %v249
    %v266 = vpack.c.b16 %v252, %v251
    %v267 = vpack.c.b16 %v254, %v253
    %v268 = vpack.c.b16 %v256, %v255
    %v269 = vpack.c.b16 %v258, %v257
    %v270 = vpack.c.b16 %v260, %v259
    %v271 = vpack.c.b16 %v262, %v261
    %v272 = vpack.c.b16 %v264, %v263
    %281 = vmatpush.bf16.msra.mxu0 %v272
    %282 = vmatpush.bf16.msra.mxu0 %v271
    %283 = vmatpush.bf16.msra.mxu0 %v270
    %284 = vmatpush.bf16.msra.mxu0 %v269
    %285 = vmatpush.bf16.msra.mxu0 %v268
    %286 = vmatpush.bf16.msra.mxu0 %v267
    %287 = vmatpush.bf16.msra.mxu0 %v266
    %288 = vmatpush.bf16.msra.mxu0 %v265
    %289 = vmatmul.bf16.gmra.mxu0 %v212
    %v290 = vpop.f32.mrf.mxu0
    %v291 = vadd.f32 %v231, %v290
    %v292 = vpop.f32.mrf.mxu0
    %293 = vdwg.mxu0
    %v294 = vmul.f32 %v291, 1.702
    %v295 = vxor.u32 %v294, 2147483648
    %v296 = vmul.f32 %v295, 1.442695
    %v297 = vpow.pop %v296
    %v298 = vadd.f32 %v297, 1.0
    %v299 = vrcp.pop %v298
    %v300 = vmul.f32 %v298, %v299
    %v301 = vsub.f32 1.0, %v300
    %v302 = vmul.f32 %v299, %v301
    %v303 = vadd.f32 %v299, %v302
    %vm304 = vweird.f32 %v298
    %vm305 = vweird.f32 %v299
    %vm306 = vmor %vm304, %vm305
    %v307 = vsel %vm306, %v299, %v303
    %v308 = vand.u32 2147483647, %v298
    %vm309 = vcmp.eq.f32.partialorder %v308, 8.507059e+37
    %v310 = vand.u32 %v298, 2147483648
    %v311 = vor.u32 1.1754944e-38, %v310
    %v312 = vsel %vm309, %v311, %v307
    %v313 = vmul.f32 1.0, %v312
    %v314 = vmul.f32 %v291, %v313
    %v315 = vpack.c.bf16 %v314, %v314
    %v316 = vld [vmem:[#allocation8] sm:$0xf]
    %v317 = vld [vmem:[#allocation8 + $0x4] sm:$0xf]
    %v318 = vld [vmem:[#allocation8 + $0x8] sm:$0xf]
    %v319 = vld [vmem:[#allocation8 + $0xc] sm:$0xf]
    %v320 = vld [vmem:[#allocation8 + $0x10] sm:$0xf]
    %v321 = vld [vmem:[#allocation8 + $0x14] sm:$0xf]
    %v322 = vld [vmem:[#allocation8 + $0x18] sm:$0xf]
    %v323 = vld [vmem:[#allocation8 + $0x1c] sm:$0xf]
    %v324 = vld [vmem:[#allocation8 + $0x20] sm:$0xf]
    %v325 = vld [vmem:[#allocation8 + $0x24] sm:$0xf]
    %v326 = vld [vmem:[#allocation8 + $0x28] sm:$0xf]
    %v327 = vld [vmem:[#allocation8 + $0x2c] sm:$0xf]
    %v328 = vld [vmem:[#allocation8 + $0x30] sm:$0xf]
    %v329 = vld [vmem:[#allocation8 + $0x34] sm:$0xf]
    %v330 = vld [vmem:[#allocation8 + $0x38] sm:$0xf]
    %v331 = vld [vmem:[#allocation8 + $0x3c] sm:$0xf]
    %v332 = vld [vmem:[%s6] sm:$0x1]
    %v334 = vperm.slane %v332, 0
    %v352 = vunpack.c.l.b16 %v316
    %v353 = vunpack.c.l.b16 %v317
    %v354 = vunpack.c.l.b16 %v318
    %v355 = vunpack.c.l.b16 %v319
    %v356 = vunpack.c.l.b16 %v320
    %v357 = vunpack.c.l.b16 %v321
    %v358 = vunpack.c.l.b16 %v322
    %v359 = vunpack.c.l.b16 %v323
    %v360 = vunpack.c.l.b16 %v324
    %v361 = vunpack.c.l.b16 %v325
    %v362 = vunpack.c.l.b16 %v326
    %v363 = vunpack.c.l.b16 %v327
    %v364 = vunpack.c.l.b16 %v328
    %v365 = vunpack.c.l.b16 %v329
    %v366 = vunpack.c.l.b16 %v330
    %v367 = vunpack.c.l.b16 %v331
    %v368 = vpack.c.b16 %v353, %v352
    %v369 = vpack.c.b16 %v355, %v354
    %v370 = vpack.c.b16 %v357, %v356
    %v371 = vpack.c.b16 %v359, %v358
    %v372 = vpack.c.b16 %v361, %v360
    %v373 = vpack.c.b16 %v363, %v362
    %v374 = vpack.c.b16 %v365, %v364
    %v375 = vpack.c.b16 %v367, %v366
    %384 = vmatpush.bf16.msra.mxu0 %v375
    %385 = vmatpush.bf16.msra.mxu0 %v374
    %386 = vmatpush.bf16.msra.mxu0 %v373
    %387 = vmatpush.bf16.msra.mxu0 %v372
    %388 = vmatpush.bf16.msra.mxu0 %v371
    %389 = vmatpush.bf16.msra.mxu0 %v370
    %390 = vmatpush.bf16.msra.mxu0 %v369
    %391 = vmatpush.bf16.msra.mxu0 %v368
    %392 = vmatmul.bf16.gmra.mxu0 %v315
    %v393 = vpop.f32.mrf.mxu0
    %v394 = vadd.f32 %v334, %v393
    %v395 = vpop.f32.mrf.mxu0
    %396 = vdwg.mxu0
    %v397 = vmul.f32 %v394, 1.702
    %v398 = vxor.u32 %v397, 2147483648
    %v399 = vmul.f32 %v398, 1.442695
    %v400 = vpow.pop %v399
    %v401 = vadd.f32 %v400, 1.0
    %v402 = vrcp.pop %v401
    %v403 = vmul.f32 %v401, %v402
    %v404 = vsub.f32 1.0, %v403
    %v405 = vmul.f32 %v402, %v404
    %v406 = vadd.f32 %v402, %v405
    %vm407 = vweird.f32 %v401
    %vm408 = vweird.f32 %v402
    %vm409 = vmor %vm407, %vm408
    %v410 = vsel %vm409, %v402, %v406
    %v411 = vand.u32 2147483647, %v401
    %vm412 = vcmp.eq.f32.partialorder %v411, 8.507059e+37
    %v413 = vand.u32 %v401, 2147483648
    %v414 = vor.u32 1.1754944e-38, %v413
    %v415 = vsel %vm412, %v414, %v410
    %v416 = vmul.f32 1.0, %v415
    %v417 = vmul.f32 %v394, %v416
    %v418 = vpack.c.bf16 %v417, %v417
    %v419 = vld [vmem:[#allocation10] sm:$0xf]
    %v420 = vld [vmem:[#allocation10 + $0x4] sm:$0xf]
    %v421 = vld [vmem:[#allocation10 + $0x8] sm:$0xf]
    %v422 = vld [vmem:[#allocation10 + $0xc] sm:$0xf]
    %v423 = vld [vmem:[#allocation10 + $0x10] sm:$0xf]
    %v424 = vld [vmem:[#allocation10 + $0x14] sm:$0xf]
    %v425 = vld [vmem:[#allocation10 + $0x18] sm:$0xf]
    %v426 = vld [vmem:[#allocation10 + $0x1c] sm:$0xf]
    %v427 = vld [vmem:[#allocation10 + $0x20] sm:$0xf]
    %v428 = vld [vmem:[#allocation10 + $0x24] sm:$0xf]
    %v429 = vld [vmem:[#allocation10 + $0x28] sm:$0xf]
    %v430 = vld [vmem:[#allocation10 + $0x2c] sm:$0xf]
    %v431 = vld [vmem:[#allocation10 + $0x30] sm:$0xf]
    %v432 = vld [vmem:[#allocation10 + $0x34] sm:$0xf]
    %v433 = vld [vmem:[#allocation10 + $0x38] sm:$0xf]
    %v434 = vld [vmem:[#allocation10 + $0x3c] sm:$0xf]
    %v435 = vld [vmem:[%s8] sm:$0x1]
    %v437 = vperm.slane %v435, 0
    %v455 = vunpack.c.l.b16 %v419
    %v456 = vunpack.c.l.b16 %v420
    %v457 = vunpack.c.l.b16 %v421
    %v458 = vunpack.c.l.b16 %v422
    %v459 = vunpack.c.l.b16 %v423
    %v460 = vunpack.c.l.b16 %v424
    %v461 = vunpack.c.l.b16 %v425
    %v462 = vunpack.c.l.b16 %v426
    %v463 = vunpack.c.l.b16 %v427
    %v464 = vunpack.c.l.b16 %v428
    %v465 = vunpack.c.l.b16 %v429
    %v466 = vunpack.c.l.b16 %v430
    %v467 = vunpack.c.l.b16 %v431
    %v468 = vunpack.c.l.b16 %v432
    %v469 = vunpack.c.l.b16 %v433
    %v470 = vunpack.c.l.b16 %v434
    %v471 = vpack.c.b16 %v456, %v455
    %v472 = vpack.c.b16 %v458, %v457
    %v473 = vpack.c.b16 %v460, %v459
    %v474 = vpack.c.b16 %v462, %v461
    %v475 = vpack.c.b16 %v464, %v463
    %v476 = vpack.c.b16 %v466, %v465
    %v477 = vpack.c.b16 %v468, %v467
    %v478 = vpack.c.b16 %v470, %v469
    %487 = vmatpush.bf16.msra.mxu0 %v478
    %488 = vmatpush.bf16.msra.mxu0 %v477
    %489 = vmatpush.bf16.msra.mxu0 %v476
    %490 = vmatpush.bf16.msra.mxu0 %v475
    %491 = vmatpush.bf16.msra.mxu0 %v474
    %492 = vmatpush.bf16.msra.mxu0 %v473
    %493 = vmatpush.bf16.msra.mxu0 %v472
    %494 = vmatpush.bf16.msra.mxu0 %v471
    %495 = vmatmul.bf16.gmra.mxu0 %v418
    %v496 = vpop.f32.mrf.mxu0
    %v497 = vadd.f32 %v437, %v496
    %v498 = vpop.f32.mrf.mxu0
    %499 = vdwg.mxu0
    %500 = vst [vmem:[#allocation11] sm:$0xff] %v497
    // Predicated region
    $region58: #{tpu_custom_call.1} parent=1 // pred_check
      _
    $region59: #{tpu_custom_call.1} parent=1 // pred_check_branch
      %502 = sbr.rel (0) target = $region61
    $region60: #{tpu_custom_call.1} parent=1 // pred_region
      %504 = vsyncadd [#allocation4], 0
      %s506 = sshll.u32 [#allocation11], 4
      %s507 = int_to_ptr.vmem [resolvable:$true] %s506
      %s508 = sshll.u32 %s9, 4
      %s509 = int_to_ptr.hbm [resolvable:$true] %s508
      %511 = dma.vmem_to_hbm [thread:$0]  %s507, 128, %s509, [#allocation4]
    $region61: #{tpu_custom_call.1} parent=1 // pred_fallthru
      _
    // Predicated region
    $region62: #{tpu_custom_call.1} parent=1 // pred_check
      _
    $region63: #{tpu_custom_call.1} parent=1 // pred_check_branch
      %513 = sbr.rel (0) target = $region65
    $region64: #{tpu_custom_call.1} parent=1 // pred_region
      %515 = dma.done [#allocation4], 128
    $region65: #{tpu_custom_call.1} parent=1 // pred_fallthru
      _
    %516 = vsyncpa [#allocation3], 1
    %517 = vsyncpa [#allocation6], 1
    %518 = vsyncpa [#allocation9], 1
    %519 = vsyncpa [#allocation4], 1

</llo_original>
